<compile_context>
chip_gen: v5e
topology: v5e:2x2
jax: 0.10.0
libtpu: 0.0.40
codegen_flags: <defaults>
</compile_context>

<pallas_src>
import jax
import jax.numpy as jnp
from jax.experimental import pallas as pl
from jax.experimental.pallas import tpu as pltpu


def _stable_log1p(x):
    # Numerically-stable log1p(x) for x >= 0, built only from primitives with
    # guaranteed Mosaic lowering (log / select / basic arithmetic).  Classic
    # correction for the rounding of (1 + x); equals jnp.log1p(x) to f32 ulp.
    u = 1.0 + x
    return jnp.where(u == 1.0, x, jnp.log(u) * (x / (u - 1.0)))


def _awl_kernel(x_ref, out_ref):
    # x_ref:  (2, num) f32 in VMEM; row 0 = per-task losses, row 1 = params.
    # out_ref: (1,) f32 in SMEM (scalar result).
    losses = x_ref[0:1, :]          # (1, num)
    p = x_ref[1:2, :]               # (1, num)
    p2 = p * p
    term = 0.5 * losses / p2 + _stable_log1p(p2)
    out_ref[0] = jnp.sum(term)


def automatic_weighted_loss(losses: jax.Array, params: jax.Array) -> jax.Array:
    """losses: (num,) f32, params: (num,) f32 -> scalar f32 (shape ())."""
    num = losses.shape[0]
    # Pack both operands into a single (2, num) block: halves input DMA setups.
    packed = jnp.concatenate(
        [losses.reshape(1, num).astype(jnp.float32),
         params.reshape(1, num).astype(jnp.float32)],
        axis=0,
    )  # (2, num)

    out = pl.pallas_call(
        _awl_kernel,
        out_shape=jax.ShapeDtypeStruct((1,), jnp.float32),
        in_specs=[pl.BlockSpec(memory_space=pltpu.MemorySpace.VMEM)],
        out_specs=pl.BlockSpec(memory_space=pltpu.MemorySpace.SMEM),
    )(packed)
    # TODO(synk): training use needs a custom_vjp (grads wrt both the losses and
    # the learnable params) -- gradients do not flow through pallas_call here.
    return out.reshape(())


if __name__ == "__main__":
    num = 3
    # Deterministic parameter init, matching torch.ones(num)
    params = jnp.ones((num,), dtype=jnp.float32)

    # Deterministic example "multi-task losses" (scalar per task)
    key = jax.random.PRNGKey(0)
    losses = jax.random.uniform(key, (num,), dtype=jnp.float32, minval=0.5, maxval=2.0)

    out = automatic_weighted_loss(losses, params)
    out = jax.block_until_ready(out)

    # Pure-JAX reference check
    p2 = params ** 2
    ref = jnp.sum(0.5 / p2 * losses + jnp.log1p(p2))
    assert out.shape == ()
    assert jnp.allclose(out, ref, rtol=1e-5, atol=1e-5), (out, ref)

    print("KERNEL_OK")
</pallas_src>

<mosaic_0001>
module attributes {stable_mosaic.version = 11 : i64} {
  func.func @_awl_kernel(%arg0: memref<2x3xf32, #tpu.memory_space<vmem>>, %arg1: memref<1xf32, #tpu.memory_space<smem>>) attributes {dimension_semantics = [], scalar_prefetch = 0 : i64, scratch_operands = 0 : i64, tpu.core_type = #tpu.core_type<tc>} {
    %c0 = arith.constant 0 : index
    %c0_0 = arith.constant 0 : index
    %0 = vector.load %arg0[%c0, %c0_0] : memref<2x3xf32, #tpu.memory_space<vmem>>, vector<1x3xf32>
    %c1 = arith.constant 1 : index
    %c0_1 = arith.constant 0 : index
    %1 = vector.load %arg0[%c1, %c0_1] : memref<2x3xf32, #tpu.memory_space<vmem>>, vector<1x3xf32>
    %2 = arith.mulf %1, %1 : vector<1x3xf32>
    %cst = arith.constant 5.000000e-01 : f32
    %3 = vector.broadcast %cst : f32 to vector<1x3xf32>
    %4 = arith.mulf %3, %0 : vector<1x3xf32>
    %5 = arith.divf %4, %2 : vector<1x3xf32>
    %cst_2 = arith.constant 1.000000e+00 : f32
    %6 = vector.broadcast %cst_2 : f32 to vector<1x3xf32>
    %7 = arith.addf %6, %2 : vector<1x3xf32>
    %cst_3 = arith.constant 1.000000e+00 : f32
    %8 = vector.broadcast %cst_3 : f32 to vector<1x3xf32>
    %9 = arith.cmpf oeq, %7, %8 : vector<1x3xf32>
    %10 = math.log %7 : vector<1x3xf32>
    %cst_4 = arith.constant 1.000000e+00 : f32
    %11 = vector.broadcast %cst_4 : f32 to vector<1x3xf32>
    %12 = arith.subf %7, %11 : vector<1x3xf32>
    %13 = arith.divf %2, %12 : vector<1x3xf32>
    %14 = arith.mulf %10, %13 : vector<1x3xf32>
    %15 = arith.select %9, %2, %14 : vector<1x3xi1>, vector<1x3xf32>
    %16 = arith.addf %5, %15 : vector<1x3xf32>
    %17 = vector.shape_cast %16 : vector<1x3xf32> to vector<1x1x3xf32>
    %cst_5 = arith.constant dense<0.000000e+00> : vector<1xf32>
    %18 = vector.multi_reduction <add>, %17, %cst_5 [1, 2] : vector<1x1x3xf32> to vector<1xf32>
    %19 = vector.shape_cast %18 : vector<1xf32> to vector<1x1x1xf32>
    %20 = vector.extract %19[0, 0, 0] : f32 from vector<1x1x1xf32>
    %c0_6 = arith.constant 0 : index
    %21 = memref.load %arg1[%c0_6] : memref<1xf32, #tpu.memory_space<smem>>
    memref.store %20, %arg1[%c0_6] : memref<1xf32, #tpu.memory_space<smem>>
    return
  }
}

</mosaic_0001>

<llo_original>
// kernel: tpu_custom_call.1
$region0: #{tpu_custom_call.1}
  #allocation0 [shape = 'u32[]', space=smem, size = 0x4, offset = 0x4, fixed_abs, tag = 'smem constant byte address 0x4 - core index']
  #allocation1 [shape = 'u32[72,128]{1,0:T(1,128)}', space=vmem, size = 0x9000, scoped, tag = 'internal scratch']
  %s0 = inlined_call_operand.hbm [shape: f32[2,3], index: 0, kind: input, shape index: {}]
  %s1 = inlined_call_operand.hbm [shape: f32[1], index: 1, kind: output, shape index: {}]
  %s2 = sld [smem:[#allocation0]]
  $region18: #{tpu_custom_call.1} parent=0
    _
  %s4 = ssub.s32 1, %s2
  %s5 = scalar_select 0, %s4, %s2
  $region1: #{tpu_custom_call.1} parent=0
    #allocation2 [shape = 'u8[1024]{0}', space=vmem, size = 0x400, scoped, tag = 'input window, operand 0, single buffered']
    #allocation3 [shape = 's32[1]{0}', space=sflag, size = 0x4, scoped, tag = 'scoped memory for tpu_custom_call.1']
    #allocation4 [shape = 's32[1]{0}', space=sflag, size = 0x4, scoped, tag = 'scoped memory for tpu_custom_call.1']
    #allocation5 [shape = 'u8[512]{0}', space=smem, size = 0x200, scoped, tag = 'output window, operand 0, single buffered']
    %6 = vsyncpa [#allocation3], 0
    %7 = vsyncpa [#allocation4], 0
    // Predicated region
    $region2: #{tpu_custom_call.1} parent=1 // pred_check
      _
    $region3: #{tpu_custom_call.1} parent=1 // pred_check_branch
      %9 = sbr.rel (0) target = $region5
    $region4: #{tpu_custom_call.1} parent=1 // pred_region
      %11 = vsyncadd [#allocation3], 0
      %s13 = sshll.u32 %s0, 4
      %s14 = int_to_ptr.hbm [resolvable:$true] %s13
      %s15 = sshll.u32 [#allocation2], 4
      %s16 = int_to_ptr.vmem [resolvable:$true] %s15
      %18 = dma.hbm_to_vmem [thread:$0]  %s14, 32, %s16, [#allocation3]
    $region5: #{tpu_custom_call.1} parent=1 // pred_fallthru
      _
    // Predicated region
    $region6: #{tpu_custom_call.1} parent=1 // pred_check
      _
    $region7: #{tpu_custom_call.1} parent=1 // pred_check_branch
      %20 = sbr.rel (0) target = $region9
    $region8: #{tpu_custom_call.1} parent=1 // pred_region
      %22 = dma.done [#allocation3], 32
    $region9: #{tpu_custom_call.1} parent=1 // pred_fallthru
      _
    %v23 = vld [vmem:[#allocation2] sm:$0x1]
    %v24 = vld [vmem:[#allocation2 + $0x1] sm:$0x1]
    %v25 = vmul.f32 %v24, %v24
    %v26 = vmul.f32 %v23, 0.5
    %v27 = vrcp.pop %v25
    %v28 = vmul.f32 %v25, %v27
    %v29 = vsub.f32 1.0, %v28
    %v30 = vmul.f32 %v27, %v29
    %v31 = vadd.f32 %v27, %v30
    %vm32 = vweird.f32 %v25
    %vm33 = vweird.f32 %v27
    %vm34 = vmor %vm32, %vm33
    %v35 = vsel %vm34, %v27, %v31
    %v36 = vand.u32 2147483647, %v25
    %vm37 = vcmp.eq.f32.partialorder %v36, 8.507059e+37
    %v38 = vand.u32 %v25, 2147483648
    %v39 = vor.u32 1.1754944e-38, %v38
    %v40 = vsel %vm37, %v39, %v35
    %v41 = vmul.f32 %v26, %v40
    %v42 = vadd.f32 %v25, 1.0
    %vm43 = vcmp.eq.f32.partialorder %v42, 1.0
    %v44 = vlog2.pop %v42
    %v45 = vmul.f32 %v44, 0.6931472
    %v46 = vsub.f32 %v42, 1.0
    %v47 = vrcp.pop %v46
    %v48 = vmul.f32 %v46, %v47
    %v49 = vsub.f32 1.0, %v48
    %v50 = vmul.f32 %v47, %v49
    %v51 = vadd.f32 %v47, %v50
    %vm52 = vweird.f32 %v46
    %vm53 = vweird.f32 %v47
    %vm54 = vmor %vm52, %vm53
    %v55 = vsel %vm54, %v47, %v51
    %v56 = vand.u32 2147483647, %v46
    %vm57 = vcmp.eq.f32.partialorder %v56, 8.507059e+37
    %v58 = vand.u32 %v46, 2147483648
    %v59 = vor.u32 1.1754944e-38, %v58
    %v60 = vsel %vm57, %v59, %v55
    %v61 = vmul.f32 %v25, %v60
    %v62 = vmul.f32 %v45, %v61
    %v63 = vsel %vm43, %v25, %v62
    %v64 = vadd.f32 %v41, %v63
    %vm65 = vcmask 16384
    %v66 = vsel %vm65, %v64, 0.0
    %67 = vadd.xlane.f32.xlu0 %v66
    %v68 = vpop.xlane.xlu0 %67
    %v69 = vrot.slane %v68, 4
    %v70 = vadd.f32 %v68, %v69
    %v71 = vrot.slane %v70, 2
    %v72 = vadd.f32 %v70, %v71
    %v73 = vrot.slane %v72, 1
    %v74 = vadd.f32 %v72, %v73
    %s75 = vtos %v74
    %s76 = scalar_lea.smem [#allocation5], 0
    %77 = sst [smem:[%s76]] %s75
    // Predicated region
    $region10: #{tpu_custom_call.1} parent=1 // pred_check
      _
    $region11: #{tpu_custom_call.1} parent=1 // pred_check_branch
      %79 = sbr.rel (0) target = $region13
    $region12: #{tpu_custom_call.1} parent=1 // pred_region
      %81 = vsyncadd [#allocation4], 0
      %s83 = sshll.u32 %s1, 4
      %s84 = int_to_ptr.hbm [resolvable:$true] %s83
      %86 = dma.smem_to_hbm [#allocation5], 16, %s84, [#allocation4]
    $region13: #{tpu_custom_call.1} parent=1 // pred_fallthru
      _
    // Predicated region
    $region14: #{tpu_custom_call.1} parent=1 // pred_check
      _
    $region15: #{tpu_custom_call.1} parent=1 // pred_check_branch
      %88 = sbr.rel (0) target = $region17
    $region16: #{tpu_custom_call.1} parent=1 // pred_region
      %90 = dma.done [#allocation4], 16
    $region17: #{tpu_custom_call.1} parent=1 // pred_fallthru
      _
    %91 = sfence
    %92 = vsyncpa [#allocation3], 1
    %93 = vsyncpa [#allocation4], 1

</llo_original>
